<compile_context>
chip_gen: v5e
topology: v5e:2x2
jax: 0.10.0
libtpu: 0.0.40
codegen_flags: <defaults>
</compile_context>

<pallas_src>
import numpy as np
import jax
import jax.numpy as jnp
from jax.experimental import pallas as pl
from jax.experimental.pallas import tpu as pltpu


_ALLOWED_ACTIVATIONS = ("tanh", "sigmoid", "relu", "softmax", None)


def _round_up(x: int, m: int) -> int:
    return (x + m - 1) // m * m


def _sublane_multiple(dtype) -> int:
    # 32-bit dtypes pack 8 rows per vreg, 16-bit pack 16, 8-bit pack 32.
    return {4: 8, 2: 16, 1: 32}.get(jnp.dtype(dtype).itemsize, 8)


def _vmem_limit_bytes() -> int:
    # ~75% of physical VMEM, capped at 112 MiB:
    #  - v7x (64 MiB physical): leaves headroom for compiler scratch / semaphores.
    #  - v5e/v6e (128 MiB physical): lets larger tiles / deeper buffering fit.
    try:
        cap = int(pltpu.get_tpu_info().vmem_capacity_bytes)
        return int(min(cap * 3 // 4, 112 * 1024 * 1024))
    except Exception:
        return 48 * 1024 * 1024


def _make_kernel(activation, n_valid, fuse_softmax):
    """Fused (x @ W) -> *scale + shift -> activation kernel over a 3-D grid."""

    def kernel(x_ref, w_ref, scale_ref, shift_ref, o_ref, acc_ref):
        k = pl.program_id(2)

        @pl.when(k == 0)
        def _init():
            acc_ref[...] = jnp.zeros_like(acc_ref)

        # bf16 x bf16 -> f32 accumulation on the MXU.
        acc_ref[...] += jnp.dot(
            x_ref[...], w_ref[...], preferred_element_type=jnp.float32
        )

        @pl.when(k == pl.num_programs(2) - 1)
        def _finalize():
            # Folded Linear-bias + BatchNorm1d(eval) affine, then activation.
            y = acc_ref[...] * scale_ref[...] + shift_ref[...]
            if activation == "relu":
                y = jnp.maximum(y, 0.0)
            elif activation == "tanh":
                y = jnp.tanh(y)
            elif activation == "sigmoid":
                y = jax.nn.sigmoid(y)
            elif activation == "softmax" and fuse_softmax:
                # Whole N fits in this tile: mask padded lanes to -inf and do the
                # row softmax in-kernel (row reduce on XLU, exp on EUP).
                col = jax.lax.broadcasted_iota(jnp.int32, y.shape, 1)
                y = jnp.where(col < n_valid, y, -jnp.inf)
                y = y - jnp.max(y, axis=-1, keepdims=True)
                e = jnp.exp(y)
                y = e / jnp.sum(e, axis=-1, keepdims=True)
            # activation None -> identity.
            o_ref[...] = y.astype(o_ref.dtype)

    return kernel


def prepare_linear_block(
    weight,          # (C_out, C_in) -- PyTorch nn.Linear layout
    bias,            # (C_out,)
    gamma=None,      # BatchNorm1d weight
    beta=None,       # BatchNorm1d bias
    running_mean=None,
    running_var=None,
    *,
    batch_norm=True,
    eps=1e-5,
    tn=512,
    tk=512,
    compute_dtype=jnp.bfloat16,
):
    """One-time parameter prep: fold BN, transpose/pad/cast the weight."""
    N, K = weight.shape

    # Keep the output-tile width 256-aligned (v6e/v7x MXU is 2x256x256); K tile
    # only needs 128 alignment (zero K-padding is benign for the dot).
    tn = min(tn, _round_up(N, 256))
    tk = min(tk, _round_up(K, 128))
    Np, Kp = _round_up(N, tn), _round_up(K, tk)

    # Fold nn.Linear bias + eval-mode BatchNorm1d into per-channel (scale, shift):
    #   BN(z0 + b) = z0 * scale + shift,  z0 = x @ W^T,
    #   scale = gamma / sqrt(var + eps),  shift = (b - mean) * scale + beta
    if batch_norm:
        scale = gamma.astype(jnp.float32) / jnp.sqrt(
            running_var.astype(jnp.float32) + eps
        )
        shift = (bias.astype(jnp.float32) - running_mean.astype(jnp.float32)) * scale \
            + beta.astype(jnp.float32)
    else:
        scale = jnp.ones((N,), jnp.float32)
        shift = bias.astype(jnp.float32)

    # Static parameter: transpose + pad + bf16 cast ONCE, not per forward call.
    wt = jnp.pad(weight.T, ((0, Kp - K), (0, Np - N))).astype(compute_dtype)
    scale_p = jnp.pad(scale, (0, Np - N)).reshape(1, Np)
    shift_p = jnp.pad(shift, (0, Np - N)).reshape(1, Np)

    return dict(
        wt=wt, scale=scale_p, shift=shift_p,
        n=N, k=K, np_=Np, kp=Kp, tn=tn, tk=tk,
        compute_dtype=compute_dtype,
    )


def linear_block_apply(x, params, *, activation="relu", tm=1024, out_dtype=None):
    """y = Dropout(Act(BatchNorm1d(x @ W^T + b))) with Dropout == identity."""
    if activation not in _ALLOWED_ACTIVATIONS:
        raise ValueError(
            f"Invalid activation, must be one of {_ALLOWED_ACTIVATIONS}"
        )

    M, K = x.shape
    assert K == params["k"], (K, params["k"])
    out_dtype = out_dtype if out_dtype is not None else x.dtype
    cdt = params["compute_dtype"]
    Kp, Np, tn, tk = params["kp"], params["np_"], params["tn"], params["tk"]

    # M-tile rounding keyed off the MXU input dtype (bf16 -> 16-row sublanes).
    sub = _sublane_multiple(cdt)
    mp0 = _round_up(M, sub)
    tm = min(tm, mp0)
    # v7x has 2 TensorCores: if M would be one big tile, split into two blocks
    # so the "parallel" M grid axis has work to shard across cores.
    if tm == mp0 and tm >= 512:
        tm = _round_up((mp0 + 1) // 2, sub)
    Mp = _round_up(M, tm)

    xc = x.astype(cdt)
    if (Mp, Kp) != (M, K):
        xc = jnp.pad(xc, ((0, Mp - M), (0, Kp - K)))

    grid = (Mp // tm, Np // tn, Kp // tk)
    fuse_softmax = (activation == "softmax") and (Np == tn)
    if activation == "softmax" and not fuse_softmax:
        kernel_act = None
    else:
        kernel_act = activation

    out = pl.pallas_call(
        _make_kernel(kernel_act, params["n"], fuse_softmax),
        out_shape=jax.ShapeDtypeStruct((Mp, Np), out_dtype),
        grid_spec=pltpu.PrefetchScalarGridSpec(
            num_scalar_prefetch=0,
            grid=grid,
            in_specs=[
                pl.BlockSpec((tm, tk), lambda i, j, k: (i, k)),   # x tile (bf16)
                pl.BlockSpec((tk, tn), lambda i, j, k: (k, j)),   # W^T tile (bf16)
                pl.BlockSpec((1, tn), lambda i, j, k: (0, j)),    # scale (f32)
                pl.BlockSpec((1, tn), lambda i, j, k: (0, j)),    # shift (f32)
            ],
            out_specs=pl.BlockSpec((tm, tn), lambda i, j, k: (i, j)),
            scratch_shapes=[pltpu.VMEM((tm, tn), jnp.float32)],
        ),
        compiler_params=pltpu.CompilerParams(
            dimension_semantics=("parallel", "parallel", "arbitrary"),
            vmem_limit_bytes=_vmem_limit_bytes(),
        ),
    )(xc, params["wt"], params["scale"], params["shift"])

    out = out[:M, : params["n"]]
    if activation == "softmax" and not fuse_softmax:
        # TODO(synk): softmax across multiple output-column tiles needs a cross-tile row reduction; done in XLA here.
        out = jax.nn.softmax(out, axis=1)
    # Dropout(p): identity at inference (module default p=0.0).
    return out


def linear_block_forward(
    x, weight, bias, gamma=None, beta=None, running_mean=None, running_var=None,
    *, activation="relu", batch_norm=True, eps=1e-5,
):
    """Convenience wrapper (prep + apply). Prefer caching prepare_linear_block."""
    params = prepare_linear_block(
        weight, bias, gamma, beta, running_mean, running_var,
        batch_norm=batch_norm, eps=eps,
    )
    return linear_block_apply(x, params, activation=activation)


if __name__ == "__main__":
    key = jax.random.PRNGKey(0)
    kx, kw, kb, kg, kbt, km, kv = jax.random.split(key, 7)

    # m6Anet read-level encoder first Linear: input_channel=66, output_channel=150.
    B, C_in, C_out = 32, 66, 150
    eps = 1e-5

    # Quantize values to multiples of 1/8 (weights 1/64) so every input is
    # exactly bf16-representable -> the bf16 MXU path matches the f32 reference
    # to f32-accumulation rounding and the correctness check can be tight.
    def q(v):
        return jnp.round(v * 8.0) / 8.0

    x = q(jax.random.normal(kx, (B, C_in), jnp.float32))
    weight = q(jax.random.normal(kw, (C_out, C_in), jnp.float32)) * 0.125
    bias = q(jax.random.normal(kb, (C_out,), jnp.float32)) * 0.125
    gamma = 1.0 + q(jax.random.normal(kg, (C_out,), jnp.float32)) * 0.125
    beta = q(jax.random.normal(kbt, (C_out,), jnp.float32)) * 0.125
    running_mean = q(jax.random.normal(km, (C_out,), jnp.float32)) * 0.125
    running_var = 1.0 + 0.25 * jax.random.uniform(kv, (C_out,), jnp.float32)

    # Pure-JAX reference of Linear -> BatchNorm1d(eval).
    z = x @ weight.T + bias
    z_bn = (z - running_mean) / jnp.sqrt(running_var + eps) * gamma + beta

    # One-time parameter prep (cached weight transpose/pad/bf16 cast).
    params = prepare_linear_block(
        weight, bias, gamma, beta, running_mean, running_var,
        batch_norm=True, eps=eps,
    )

    # ReLU path (module default activation).
    out_relu = jax.block_until_ready(
        linear_block_apply(x, params, activation="relu")
    )
    ref_relu = jnp.maximum(z_bn, 0.0)
    assert out_relu.shape == (B, C_out), out_relu.shape
    np.testing.assert_allclose(
        np.asarray(out_relu), np.asarray(ref_relu), rtol=1e-4, atol=1e-4
    )

    # Softmax(dim=1) path (fused in-kernel since N fits one output tile).
    out_sm = jax.block_until_ready(
        linear_block_apply(x, params, activation="softmax")
    )
    ref_sm = jax.nn.softmax(z_bn, axis=1)
    np.testing.assert_allclose(
        np.asarray(out_sm), np.asarray(ref_sm), rtol=1e-4, atol=1e-5
    )

    print("KERNEL_OK")
</pallas_src>

<mosaic_0001>
module attributes {stable_mosaic.version = 11 : i64} {
  func.func @kernel(%arg0: i32, %arg1: i32, %arg2: i32, %arg3: memref<32x128xbf16, #tpu.memory_space<vmem>>, %arg4: memref<128x256xbf16, #tpu.memory_space<vmem>>, %arg5: memref<1x256xf32, #tpu.memory_space<vmem>>, %arg6: memref<1x256xf32, #tpu.memory_space<vmem>>, %arg7: memref<32x256xf32, #tpu.memory_space<vmem>>, %arg8: memref<32x256xf32, #tpu.memory_space<vmem>>) attributes {dimension_semantics = [#tpu.dimension_semantics<parallel>, #tpu.dimension_semantics<parallel>, #tpu.dimension_semantics<arbitrary>], iteration_bounds = array<i64: 1, 1, 1>, scalar_prefetch = 0 : i64, scratch_operands = 1 : i64, tpu.core_type = #tpu.core_type<tc>, window_params = [{transform_indices = @transform_0, window_bounds = array<i64: 32, 128>}, {transform_indices = @transform_1, window_bounds = array<i64: 128, 256>}, {transform_indices = @transform_2, window_bounds = array<i64: 1, 256>}, {transform_indices = @transform_3, window_bounds = array<i64: 1, 256>}, {transform_indices = @transform_4, window_bounds = array<i64: 32, 256>}]} {
    %c0_i32 = arith.constant 0 : i32
    %0 = arith.cmpi eq, %arg2, %c0_i32 : i32
    %1 = arith.extui %0 : i1 to i32
    %c0_i32_0 = arith.constant 0 : i32
    %2 = arith.cmpi ne, %1, %c0_i32_0 : i32
    scf.if %2 {
      %cst_10 = arith.constant 0.000000e+00 : f32
      %12 = vector.broadcast %cst_10 : f32 to vector<32x256xf32>
      %c0_11 = arith.constant 0 : index
      %c0_12 = arith.constant 0 : index
      %13 = vector.load %arg8[%c0_11, %c0_12] : memref<32x256xf32, #tpu.memory_space<vmem>>, vector<32x256xf32>
      tpu.vector_store %arg8[%c0_11, %c0_12], %12 {strides = array<i32>} : memref<32x256xf32, #tpu.memory_space<vmem>>, vector<32x256xf32>,
    } else {
    }
    %c0 = arith.constant 0 : index
    %c0_1 = arith.constant 0 : index
    %3 = vector.load %arg8[%c0, %c0_1] : memref<32x256xf32, #tpu.memory_space<vmem>>, vector<32x256xf32>
    %c0_2 = arith.constant 0 : index
    %c0_3 = arith.constant 0 : index
    %4 = vector.load %arg3[%c0_2, %c0_3] : memref<32x128xbf16, #tpu.memory_space<vmem>>, vector<32x128xbf16>
    %c0_4 = arith.constant 0 : index
    %c0_5 = arith.constant 0 : index
    %5 = vector.load %arg4[%c0_4, %c0_5] : memref<128x256xbf16, #tpu.memory_space<vmem>>, vector<128x256xbf16>
    %cst = arith.constant dense<0.000000e+00> : vector<32x256xf32>
    %6 = tpu.matmul %4, %5, %cst {dimension_numbers = #tpu.dot_dimension_numbers<[1], [0], [0], [1], [0, 0, 1, 1], [], []>} : vector<32x128xbf16>, vector<128x256xbf16>, vector<32x256xf32> -> vector<32x256xf32>
    %7 = arith.addf %3, %6 : vector<32x256xf32>
    %c0_6 = arith.constant 0 : index
    %c0_7 = arith.constant 0 : index
    %8 = vector.load %arg8[%c0_6, %c0_7] : memref<32x256xf32, #tpu.memory_space<vmem>>, vector<32x256xf32>
    tpu.vector_store %arg8[%c0_6, %c0_7], %7 {strides = array<i32>} : memref<32x256xf32, #tpu.memory_space<vmem>>, vector<32x256xf32>,
    %c0_i32_8 = arith.constant 0 : i32
    %9 = arith.cmpi eq, %arg2, %c0_i32_8 : i32
    %10 = arith.extui %9 : i1 to i32
    %c0_i32_9 = arith.constant 0 : i32
    %11 = arith.cmpi ne, %10, %c0_i32_9 : i32
    scf.if %11 {
      %c0_10 = arith.constant 0 : index
      %c0_11 = arith.constant 0 : index
      %12 = vector.load %arg8[%c0_10, %c0_11] : memref<32x256xf32, #tpu.memory_space<vmem>>, vector<32x256xf32>
      %c0_12 = arith.constant 0 : index
      %c0_13 = arith.constant 0 : index
      %13 = vector.load %arg5[%c0_12, %c0_13] : memref<1x256xf32, #tpu.memory_space<vmem>>, vector<1x256xf32>
      %14 = vector.broadcast %13 : vector<1x256xf32> to vector<32x256xf32>
      %15 = arith.mulf %12, %14 : vector<32x256xf32>
      %c0_14 = arith.constant 0 : index
      %c0_15 = arith.constant 0 : index
      %16 = vector.load %arg6[%c0_14, %c0_15] : memref<1x256xf32, #tpu.memory_space<vmem>>, vector<1x256xf32>
      %17 = vector.broadcast %16 : vector<1x256xf32> to vector<32x256xf32>
      %18 = arith.addf %15, %17 : vector<32x256xf32>
      %cst_16 = arith.constant 0.000000e+00 : f32
      %19 = vector.broadcast %cst_16 : f32 to vector<32x256xf32>
      %20 = arith.maximumf %18, %19 : vector<32x256xf32>
      %c0_17 = arith.constant 0 : index
      %c0_18 = arith.constant 0 : index
      %21 = vector.load %arg7[%c0_17, %c0_18] : memref<32x256xf32, #tpu.memory_space<vmem>>, vector<32x256xf32>
      tpu.vector_store %arg7[%c0_17, %c0_18], %20 {strides = array<i32>} : memref<32x256xf32, #tpu.memory_space<vmem>>, vector<32x256xf32>,
    } else {
    }
    return
  }
  func.func @transform_0(%arg0: i32, %arg1: i32, %arg2: i32) -> (i32, i32) {
    %c0_i32 = arith.constant 0 : i32
    return %arg0, %arg2 : i32, i32
  }
  func.func @transform_1(%arg0: i32, %arg1: i32, %arg2: i32) -> (i32, i32) {
    %c0_i32 = arith.constant 0 : i32
    return %arg2, %arg1 : i32, i32
  }
  func.func @transform_2(%arg0: i32, %arg1: i32, %arg2: i32) -> (i32, i32) {
    %c0_i32 = arith.constant 0 : i32
    %c0_i32_0 = arith.constant 0 : i32
    return %c0_i32, %arg1 : i32, i32
  }
  func.func @transform_3(%arg0: i32, %arg1: i32, %arg2: i32) -> (i32, i32) {
    %c0_i32 = arith.constant 0 : i32
    %c0_i32_0 = arith.constant 0 : i32
    return %c0_i32, %arg1 : i32, i32
  }
  func.func @transform_4(%arg0: i32, %arg1: i32, %arg2: i32) -> (i32, i32) {
    %c0_i32 = arith.constant 0 : i32
    return %arg0, %arg1 : i32, i32
  }
}

</mosaic_0001>

<llo_original>
// kernel: tpu_custom_call.1
$region0: #{tpu_custom_call.1}
  #allocation0 [shape = 'u32[]', space=smem, size = 0x4, offset = 0x4, fixed_abs, tag = 'smem constant byte address 0x4 - core index']
  #allocation1 [shape = 'u32[72,128]{1,0:T(1,128)}', space=vmem, size = 0x9000, scoped, tag = 'internal scratch']
  #allocation2 [shape = 'f32[32,256]{1,0:T(8,128)}', space=vmem, size = 0x8000, scoped, tag = 'scratch operand']
  %s0 = inlined_call_operand.hbm [shape: bf16[32,128], index: 0, kind: input, shape index: {}]
  %s1 = inlined_call_operand.hbm [shape: bf16[128,256], index: 1, kind: input, shape index: {}]
  %s2 = inlined_call_operand.hbm [shape: f32[1,256], index: 2, kind: input, shape index: {}]
  %s3 = inlined_call_operand.vmem [shape: f32[1,256], index: 3, kind: input, shape index: {}]
  %s4 = inlined_call_operand.hbm [shape: f32[32,256], index: 4, kind: output, shape index: {}]
  %s5 = sld [smem:[#allocation0]]
  $region46: #{tpu_custom_call.1} parent=0
    _
  %s7 = ssub.s32 1, %s5
  %s8 = scalar_select 0, %s7, %s5
  $region1: #{tpu_custom_call.1} parent=0
    #allocation3 [shape = 'u8[8192]{0}', space=vmem, size = 0x2000, scoped, tag = 'input window, operand 0, single buffered']
    #allocation4 [shape = 's32[1]{0}', space=sflag, size = 0x4, scoped, tag = 'scoped memory for tpu_custom_call.1']
    #allocation5 [shape = 's32[1]{0}', space=sflag, size = 0x4, scoped, tag = 'scoped memory for tpu_custom_call.1']
    #allocation6 [shape = 'u8[65536]{0}', space=vmem, size = 0x10000, scoped, tag = 'input window, operand 1, single buffered']
    #allocation7 [shape = 's32[1]{0}', space=sflag, size = 0x4, scoped, tag = 'scoped memory for tpu_custom_call.1']
    #allocation8 [shape = 'u8[1024]{0}', space=vmem, size = 0x400, scoped, tag = 'input window, operand 2, single buffered']
    #allocation9 [shape = 'u8[32768]{0}', space=vmem, size = 0x8000, scoped, tag = 'output window, operand 0, single buffered']
    %9 = vsyncpa [#allocation4], 0
    %10 = vsyncpa [#allocation7], 0
    %11 = vsyncpa [#allocation5], 0
    // Predicated region
    $region2: #{tpu_custom_call.1} parent=1 // pred_check
      _
    $region3: #{tpu_custom_call.1} parent=1 // pred_check_branch
      %13 = sbr.rel (0) target = $region5
    $region4: #{tpu_custom_call.1} parent=1 // pred_region
      %15 = vsyncadd [#allocation4], 0
      %s16 = sshll.u32 %s0, 4
      %s17 = int_to_ptr.hbm [resolvable:$true] %s16
      %s18 = sshll.u32 [#allocation3], 4
      %s19 = int_to_ptr.vmem [resolvable:$true] %s18
      %24 = dma.hbm_to_vmem [thread:$0]  %s17, 256, %s19, [#allocation4], 64, 64, 4
    $region5: #{tpu_custom_call.1} parent=1 // pred_fallthru
      _
    // Predicated region
    $region6: #{tpu_custom_call.1} parent=1 // pred_check
      _
    $region7: #{tpu_custom_call.1} parent=1 // pred_check_branch
      %26 = sbr.rel (0) target = $region9
    $region8: #{tpu_custom_call.1} parent=1 // pred_region
      %28 = vsyncadd [#allocation7], 0
      %s29 = sshll.u32 %s1, 4
      %s30 = int_to_ptr.hbm [resolvable:$true] %s29
      %s31 = sshll.u32 [#allocation6], 4
      %s32 = int_to_ptr.vmem [resolvable:$true] %s31
      %37 = dma.hbm_to_vmem [thread:$0]  %s30, 2048, %s32, [#allocation7], 128, 128, 8
    $region9: #{tpu_custom_call.1} parent=1 // pred_fallthru
      _
    // Predicated region
    $region10: #{tpu_custom_call.1} parent=1 // pred_check
      _
    $region11: #{tpu_custom_call.1} parent=1 // pred_check_branch
      %39 = sbr.rel (0) target = $region13
    $region12: #{tpu_custom_call.1} parent=1 // pred_region
      %41 = vsyncadd [#allocation7], 0
      %s43 = sshll.u32 %s2, 4
      %s44 = int_to_ptr.hbm [resolvable:$true] %s43
      %s45 = sshll.u32 [#allocation8], 4
      %s46 = int_to_ptr.vmem [resolvable:$true] %s45
      %48 = dma.hbm_to_vmem [thread:$0]  %s44, 32, %s46, [#allocation7]
    $region13: #{tpu_custom_call.1} parent=1 // pred_fallthru
      _
    // Predicated region
    $region14: #{tpu_custom_call.1} parent=1 // pred_check
      _
    $region15: #{tpu_custom_call.1} parent=1 // pred_check_branch
      %50 = sbr.rel (0) target = $region17
    $region16: #{tpu_custom_call.1} parent=1 // pred_region
      _
    $region17: #{tpu_custom_call.1} parent=1 // pred_fallthru
      _
    // Predicated region
    $region18: #{tpu_custom_call.1} parent=1 // pred_check
      _
    $region19: #{tpu_custom_call.1} parent=1 // pred_check_branch
      %52 = sbr.rel (0) target = $region21
    $region20: #{tpu_custom_call.1} parent=1 // pred_region
      %54 = dma.done [#allocation4], 256
    $region21: #{tpu_custom_call.1} parent=1 // pred_fallthru
      _
    // Predicated region
    $region22: #{tpu_custom_call.1} parent=1 // pred_check
      _
    $region23: #{tpu_custom_call.1} parent=1 // pred_check_branch
      %56 = sbr.rel (0) target = $region25
    $region24: #{tpu_custom_call.1} parent=1 // pred_region
      %58 = dma.done [#allocation7], 2048
    $region25: #{tpu_custom_call.1} parent=1 // pred_fallthru
      _
    // Predicated region
    $region26: #{tpu_custom_call.1} parent=1 // pred_check
      _
    $region27: #{tpu_custom_call.1} parent=1 // pred_check_branch
      %60 = sbr.rel (0) target = $region29
    $region28: #{tpu_custom_call.1} parent=1 // pred_region
      %62 = dma.done [#allocation7], 32
    $region29: #{tpu_custom_call.1} parent=1 // pred_fallthru
      _
    %p63 = scmp.eq.s32.totalorder 0, 0
    // Predicated region
    $region30: #{tpu_custom_call.1} parent=1 // pred_check
      %p64 = pneg %p63
    $region31: #{tpu_custom_call.1} parent=1 // pred_check_branch
      %66 = sbr.rel (%p64) target = $region33
    $region32: #{tpu_custom_call.1} parent=1 // pred_region
      %67 = vst [vmem:[#allocation2] sm:$0xff] 0.0
      %68 = vst [vmem:[#allocation2 + $0x8] sm:$0xff] 0.0
      %69 = vst [vmem:[#allocation2 + $0x10] sm:$0xff] 0.0
      %70 = vst [vmem:[#allocation2 + $0x18] sm:$0xff] 0.0
      %71 = vst [vmem:[#allocation2 + $0x20] sm:$0xff] 0.0
      %72 = vst [vmem:[#allocation2 + $0x28] sm:$0xff] 0.0
      %73 = vst [vmem:[#allocation2 + $0x30] sm:$0xff] 0.0
      %74 = vst [vmem:[#allocation2 + $0x38] sm:$0xff] 0.0
    $region33: #{tpu_custom_call.1} parent=1 // pred_fallthru
      _
    %v75 = vld [vmem:[#allocation2] sm:$0xff]
    %v76 = vld [vmem:[#allocation2 + $0x8] sm:$0xff]
    %v77 = vld [vmem:[#allocation2 + $0x10] sm:$0xff]
    %v78 = vld [vmem:[#allocation2 + $0x18] sm:$0xff]
    %v79 = vld [vmem:[#allocation2 + $0x20] sm:$0xff]
    %v80 = vld [vmem:[#allocation2 + $0x28] sm:$0xff]
    %v81 = vld [vmem:[#allocation2 + $0x30] sm:$0xff]
    %v82 = vld [vmem:[#allocation2 + $0x38] sm:$0xff]
    %v83 = vld [vmem:[#allocation3] sm:$0xf]
    %v84 = vld [vmem:[#allocation3 + $0x4] sm:$0xf]
    %v85 = vld [vmem:[#allocation3 + $0x8] sm:$0xf]
    %v86 = vld [vmem:[#allocation3 + $0xc] sm:$0xf]
    %v87 = vld [vmem:[#allocation6] sm:$0xff]
    %v88 = vld [vmem:[#allocation6 + $0x8] sm:$0xff]
    %v89 = vld [vmem:[#allocation6 + $0x10] sm:$0xff]
    %v90 = vld [vmem:[#allocation6 + $0x18] sm:$0xff]
    %v91 = vld [vmem:[#allocation6 + $0x20] sm:$0xff]
    %v92 = vld [vmem:[#allocation6 + $0x28] sm:$0xff]
    %v93 = vld [vmem:[#allocation6 + $0x30] sm:$0xff]
    %v94 = vld [vmem:[#allocation6 + $0x38] sm:$0xff]
    %v95 = vld [vmem:[#allocation6 + $0x40] sm:$0xff]
    %v96 = vld [vmem:[#allocation6 + $0x48] sm:$0xff]
    %v97 = vld [vmem:[#allocation6 + $0x50] sm:$0xff]
    %v98 = vld [vmem:[#allocation6 + $0x58] sm:$0xff]
    %v99 = vld [vmem:[#allocation6 + $0x60] sm:$0xff]
    %v100 = vld [vmem:[#allocation6 + $0x68] sm:$0xff]
    %v101 = vld [vmem:[#allocation6 + $0x70] sm:$0xff]
    %v102 = vld [vmem:[#allocation6 + $0x78] sm:$0xff]
    %v107 = vunpack.c.l.b16 %v83
    %v108 = vunpack.c.l.b16 %v84
    %v109 = vunpack.c.l.b16 %v85
    %v110 = vunpack.c.l.b16 %v86
    %v111 = vpack.c.b16 %v108, %v107
    %v112 = vpack.c.b16 %v110, %v109
    %v131 = vunpack.c.l.b16 %v87
    %v132 = vunpack.c.h.b16 %v87
    %v133 = vunpack.c.l.b16 %v88
    %v134 = vunpack.c.h.b16 %v88
    %v135 = vunpack.c.l.b16 %v89
    %v136 = vunpack.c.h.b16 %v89
    %v137 = vunpack.c.l.b16 %v90
    %v138 = vunpack.c.h.b16 %v90
    %v139 = vunpack.c.l.b16 %v91
    %v140 = vunpack.c.h.b16 %v91
    %v141 = vunpack.c.l.b16 %v92
    %v142 = vunpack.c.h.b16 %v92
    %v143 = vunpack.c.l.b16 %v93
    %v144 = vunpack.c.h.b16 %v93
    %v145 = vunpack.c.l.b16 %v94
    %v146 = vunpack.c.h.b16 %v94
    %v147 = vunpack.c.l.b16 %v95
    %v148 = vunpack.c.h.b16 %v95
    %v149 = vunpack.c.l.b16 %v96
    %v150 = vunpack.c.h.b16 %v96
    %v151 = vunpack.c.l.b16 %v97
    %v152 = vunpack.c.h.b16 %v97
    %v153 = vunpack.c.l.b16 %v98
    %v154 = vunpack.c.h.b16 %v98
    %v155 = vunpack.c.l.b16 %v99
    %v156 = vunpack.c.h.b16 %v99
    %v157 = vunpack.c.l.b16 %v100
    %v158 = vunpack.c.h.b16 %v100
    %v159 = vunpack.c.l.b16 %v101
    %v160 = vunpack.c.h.b16 %v101
    %v161 = vunpack.c.l.b16 %v102
    %v162 = vunpack.c.h.b16 %v102
    %v163 = vpack.c.b16 %v133, %v131
    %v164 = vpack.c.b16 %v134, %v132
    %v165 = vpack.c.b16 %v137, %v135
    %v166 = vpack.c.b16 %v138, %v136
    %v167 = vpack.c.b16 %v141, %v139
    %v168 = vpack.c.b16 %v142, %v140
    %v169 = vpack.c.b16 %v145, %v143
    %v170 = vpack.c.b16 %v146, %v144
    %v171 = vpack.c.b16 %v149, %v147
    %v172 = vpack.c.b16 %v150, %v148
    %v173 = vpack.c.b16 %v153, %v151
    %v174 = vpack.c.b16 %v154, %v152
    %v175 = vpack.c.b16 %v157, %v155
    %v176 = vpack.c.b16 %v158, %v156
    %v177 = vpack.c.b16 %v161, %v159
    %v178 = vpack.c.b16 %v162, %v160
    %195 = vmatpush.bf16.msra.mxu0 %v177
    %196 = vmatpush.bf16.msra.mxu0 %v175
    %197 = vmatpush.bf16.msra.mxu0 %v173
    %198 = vmatpush.bf16.msra.mxu0 %v171
    %199 = vmatpush.bf16.msra.mxu0 %v169
    %200 = vmatpush.bf16.msra.mxu0 %v167
    %201 = vmatpush.bf16.msra.mxu0 %v165
    %202 = vmatpush.bf16.msra.mxu0 %v163
    %203 = vmatmul.bf16.gmra.mxu0 %v111
    %v204 = vpop.f32.mrf.mxu0
    %v205 = vadd.f32 0.0, %v204
    %v206 = vpop.f32.mrf.mxu0
    %v207 = vadd.f32 0.0, %v206
    %208 = vmatmul.bf16.gmra.mxu0 %v112
    %v209 = vpop.f32.mrf.mxu0
    %v210 = vadd.f32 0.0, %v209
    %v211 = vpop.f32.mrf.mxu0
    %v212 = vadd.f32 0.0, %v211
    %213 = vdwg.mxu0
    %214 = vmatpush.bf16.msra.mxu0 %v178
    %215 = vmatpush.bf16.msra.mxu0 %v176
    %216 = vmatpush.bf16.msra.mxu0 %v174
    %217 = vmatpush.bf16.msra.mxu0 %v172
    %218 = vmatpush.bf16.msra.mxu0 %v170
    %219 = vmatpush.bf16.msra.mxu0 %v168
    %220 = vmatpush.bf16.msra.mxu0 %v166
    %221 = vmatpush.bf16.msra.mxu0 %v164
    %222 = vmatmul.bf16.gmra.mxu0 %v111
    %v223 = vpop.f32.mrf.mxu0
    %v224 = vadd.f32 0.0, %v223
    %v225 = vpop.f32.mrf.mxu0
    %v226 = vadd.f32 0.0, %v225
    %227 = vmatmul.bf16.gmra.mxu0 %v112
    %v228 = vpop.f32.mrf.mxu0
    %v229 = vadd.f32 0.0, %v228
    %v230 = vpop.f32.mrf.mxu0
    %v231 = vadd.f32 0.0, %v230
    %232 = vdwg.mxu0
    %v233 = vadd.f32 %v75, %v205
    %v234 = vadd.f32 %v76, %v224
    %v235 = vadd.f32 %v77, %v207
    %v236 = vadd.f32 %v78, %v226
    %v237 = vadd.f32 %v79, %v210
    %v238 = vadd.f32 %v80, %v229
    %v239 = vadd.f32 %v81, %v212
    %v240 = vadd.f32 %v82, %v231
    %241 = vst [vmem:[#allocation2] sm:$0xff] %v233
    %242 = vst [vmem:[#allocation2 + $0x8] sm:$0xff] %v234
    %243 = vst [vmem:[#allocation2 + $0x10] sm:$0xff] %v235
    %244 = vst [vmem:[#allocation2 + $0x18] sm:$0xff] %v236
    %245 = vst [vmem:[#allocation2 + $0x20] sm:$0xff] %v237
    %246 = vst [vmem:[#allocation2 + $0x28] sm:$0xff] %v238
    %247 = vst [vmem:[#allocation2 + $0x30] sm:$0xff] %v239
    %248 = vst [vmem:[#allocation2 + $0x38] sm:$0xff] %v240
    // Predicated region
    $region34: #{tpu_custom_call.1} parent=1 // pred_check
      %p249 = pneg %p63
    $region35: #{tpu_custom_call.1} parent=1 // pred_check_branch
      %251 = sbr.rel (%p249) target = $region37
    $region36: #{tpu_custom_call.1} parent=1 // pred_region
      %v252 = vld [vmem:[#allocation2] sm:$0xff]
      %v253 = vld [vmem:[#allocation2 + $0x8] sm:$0xff]
      %v254 = vld [vmem:[#allocation2 + $0x10] sm:$0xff]
      %v255 = vld [vmem:[#allocation2 + $0x18] sm:$0xff]
      %v256 = vld [vmem:[#allocation2 + $0x20] sm:$0xff]
      %v257 = vld [vmem:[#allocation2 + $0x28] sm:$0xff]
      %v258 = vld [vmem:[#allocation2 + $0x30] sm:$0xff]
      %v259 = vld [vmem:[#allocation2 + $0x38] sm:$0xff]
      %v260 = vld [vmem:[#allocation8] sm:$0x3]
      %v262 = vperm.slane %v260, 0
      %v263 = vperm.slane %v260, 1
      %v266 = vmul.f32 %v252, %v262
      %v267 = vmul.f32 %v253, %v263
      %v268 = vmul.f32 %v254, %v262
      %v269 = vmul.f32 %v255, %v263
      %v270 = vmul.f32 %v256, %v262
      %v271 = vmul.f32 %v257, %v263
      %v272 = vmul.f32 %v258, %v262
      %v273 = vmul.f32 %v259, %v263
      %v274 = vld [vmem:[%s3] sm:$0x3]
      %v276 = vperm.slane %v274, 0
      %v277 = vperm.slane %v274, 1
      %v280 = vadd.f32 %v266, %v276
      %v281 = vadd.f32 %v267, %v277
      %v282 = vadd.f32 %v268, %v276
      %v283 = vadd.f32 %v269, %v277
      %v284 = vadd.f32 %v270, %v276
      %v285 = vadd.f32 %v271, %v277
      %v286 = vadd.f32 %v272, %v276
      %v287 = vadd.f32 %v273, %v277
      %v288 = vmax.f32 %v280, 0.0
      %v289 = vmax.f32 %v281, 0.0
      %v290 = vmax.f32 %v282, 0.0
      %v291 = vmax.f32 %v283, 0.0
      %v292 = vmax.f32 %v284, 0.0
      %v293 = vmax.f32 %v285, 0.0
      %v294 = vmax.f32 %v286, 0.0
      %v295 = vmax.f32 %v287, 0.0
      %296 = vst [vmem:[#allocation9] sm:$0xff] %v288
      %297 = vst [vmem:[#allocation9 + $0x8] sm:$0xff] %v289
      %298 = vst [vmem:[#allocation9 + $0x10] sm:$0xff] %v290
      %299 = vst [vmem:[#allocation9 + $0x18] sm:$0xff] %v291
      %300 = vst [vmem:[#allocation9 + $0x20] sm:$0xff] %v292
      %301 = vst [vmem:[#allocation9 + $0x28] sm:$0xff] %v293
      %302 = vst [vmem:[#allocation9 + $0x30] sm:$0xff] %v294
      %303 = vst [vmem:[#allocation9 + $0x38] sm:$0xff] %v295
    $region37: #{tpu_custom_call.1} parent=1 // pred_fallthru
      _
    // Predicated region
    $region38: #{tpu_custom_call.1} parent=1 // pred_check
      _
    $region39: #{tpu_custom_call.1} parent=1 // pred_check_branch
      %305 = sbr.rel (0) target = $region41
    $region40: #{tpu_custom_call.1} parent=1 // pred_region
      %307 = vsyncadd [#allocation5], 0
      %s308 = sshll.u32 [#allocation9], 4
      %s309 = int_to_ptr.vmem [resolvable:$true] %s308
      %s310 = sshll.u32 %s4, 4
      %s311 = int_to_ptr.hbm [resolvable:$true] %s310
      %316 = dma.vmem_to_hbm [thread:$0]  %s309, 1024, %s311, [#allocation5], 256, 256, 16
    $region41: #{tpu_custom_call.1} parent=1 // pred_fallthru
      _
    // Predicated region
    $region42: #{tpu_custom_call.1} parent=1 // pred_check
      _
    $region43: #{tpu_custom_call.1} parent=1 // pred_check_branch
      %318 = sbr.rel (0) target = $region45
    $region44: #{tpu_custom_call.1} parent=1 // pred_region
      %320 = dma.done [#allocation5], 1024
    $region45: #{tpu_custom_call.1} parent=1 // pred_fallthru
      _
    %321 = vsyncpa [#allocation4], 1
    %322 = vsyncpa [#allocation7], 1
    %323 = vsyncpa [#allocation5], 1

</llo_original>
